<compile_context>
chip_gen: v5e
topology: v5e:2x2
jax: 0.10.0
libtpu: 0.0.40
codegen_flags: <defaults>
</compile_context>

<pallas_src>
import functools

import numpy as np
import jax
import jax.numpy as jnp
from jax.experimental import pallas as pl
from jax.experimental.pallas import tpu as pltpu


LANE = 128      # TPU lane width: feature dims zero-padded to this
SUBLANE = 8     # branch (attention-head) axis padded to the sublane width


def _pad_to(a, shape):
    return jnp.pad(a, [(0, t - s) for s, t in zip(a.shape, shape)])


# ------------------------------ fused kernel ------------------------------- #

def _fused_gnn_kernel(x_ref, a_ref, pre_w_ref, pre_b_ref,
                      mp_w_ref, mp_b_ref, v_ref, u_ref, wcat_ref, bc_ref,
                      o_ref, *, layers_mp, num_branches, p_out):
    """Entire MultiHeadAttnGNN forward in one kernel; H stays resident in VMEM."""
    f32 = jnp.float32

    # encoder + pre-MP MLP (encoder folded host-side):
    #   H = relu(X @ (We Wp) + (be Wp + bp))                             [N, D]
    h = jnp.maximum(
        jnp.dot(x_ref[...], pre_w_ref[...], preferred_element_type=f32)
        + pre_b_ref[...], 0.0)

    # message passing: H = relu((A_hat @ H) @ Wl + bl)
    # A_hat arrives in bf16 (half the DMA); aggregation in bf16 on the MXU
    # with f32 accumulation.
    a_bf16 = a_ref[...]
    for l in range(layers_mp):
        agg = jnp.dot(a_bf16, h.astype(jnp.bfloat16), preferred_element_type=f32)
        h = jnp.maximum(
            jnp.dot(agg, mp_w_ref[l], preferred_element_type=f32) + mp_b_ref[l], 0.0)

    # multi-branch attention pooling
    att = jnp.tanh(jnp.dot(h, v_ref[...], preferred_element_type=f32))      # [N, Ha]
    scores = jnp.dot(att, u_ref[...], preferred_element_type=f32)           # [N, K]
    # softmax over the node axis, independently per branch (f32)
    m = jnp.max(scores, axis=0, keepdims=True)
    e = jnp.exp(scores - m)
    inv_l = pl.reciprocal(jnp.sum(e, axis=0, keepdims=True), approx=True)
    alpha = e * inv_l                                                        # [N, K]

    # pooled[k, d] = sum_n alpha[n, k] * h[n, d]  (alpha^T @ H on the MXU)
    pooled = jnp.einsum("nk,nd->kd", alpha, h, preferred_element_type=f32)   # [K, D]

    # classifier over concatenated branch embeddings: one lane-dense matmul
    # against the branch-concatenated weight [D, K*O]; sum the block-diagonal
    # slices (cheap VPU adds) instead of K serialized single-row matmuls.
    full = jnp.dot(pooled, wcat_ref[...], preferred_element_type=f32)        # [K, K*O]
    logits = bc_ref[...]                                                     # [1, O]
    for k in range(num_branches):
        logits = logits + full[k:k + 1, k * p_out:(k + 1) * p_out]
    # sublane+lane dense output block -> unmasked vst (row 0 is the result)
    o_ref[...] = jnp.broadcast_to(logits, o_ref.shape).astype(o_ref.dtype)


def multi_head_attn_gnn_forward(x_p, a_hat_bf16, pp, *, layers_mp, num_branches):
    p_out = pp["cls_b"].shape[1]
    vmem = pl.BlockSpec(memory_space=pltpu.MemorySpace.VMEM)
    kernel = functools.partial(_fused_gnn_kernel, layers_mp=layers_mp,
                               num_branches=num_branches, p_out=p_out)
    return pl.pallas_call(
        kernel,
        out_shape=jax.ShapeDtypeStruct((SUBLANE, p_out), jnp.float32),
        in_specs=[vmem] * 10,
        out_specs=vmem,
        compiler_params=pltpu.CompilerParams(vmem_limit_bytes=32 * 1024 * 1024),
    )(x_p, a_hat_bf16, pp["pre_w"], pp["pre_b"],
      pp["mp_w"], pp["mp_b"], pp["attn_v"], pp["attn_u"],
      pp["cls_wcat"], pp["cls_b"])


# --------------------------- parameters / padding --------------------------- #

def make_params(key, dim_in, dim_inner, attn_hidden, num_branches, dim_out,
                layers_mp):
    ks = jax.random.split(key, 5 + layers_mp)
    s = 0.1
    return {
        "enc_w": s * jax.random.normal(ks[0], (dim_in, dim_inner), jnp.float32),
        "enc_b": jnp.zeros((1, dim_inner), jnp.float32),
        "pre_w": s * jax.random.normal(ks[1], (dim_inner, dim_inner), jnp.float32),
        "pre_b": jnp.zeros((1, dim_inner), jnp.float32),
        "attn_v": s * jax.random.normal(ks[2], (dim_inner, attn_hidden), jnp.float32),
        "attn_u": s * jax.random.normal(ks[3], (attn_hidden, num_branches), jnp.float32),
        "cls_w": s * jax.random.normal(ks[4], (num_branches, dim_inner, dim_out), jnp.float32),
        "cls_b": jnp.zeros((1, dim_out), jnp.float32),
        "mp_w": [s * jax.random.normal(ks[5 + l], (dim_inner, dim_inner), jnp.float32)
                 for l in range(layers_mp)],
        "mp_b": [jnp.zeros((1, dim_inner), jnp.float32) for _ in range(layers_mp)],
    }


def pad_params(p):
    """Fold the (linear) encoder into pre-MP, then zero-pad feature dims to the
    lane width and the branch axis to the sublane width.

    Zero padding is exact: padded V/U/W columns produce tanh(0)=0 / zero scores,
    and padded branches contribute nothing because their classifier weights are
    zero, so the logits of the real branches are unchanged.
    """
    P_IN = P_D = P_HA = P_O = LANE
    P_K = SUBLANE
    k, d, o = p["cls_w"].shape
    assert k <= P_K and d <= P_D and o <= P_O

    # fold: relu((X We + be) Wp + bp) == relu(X (We Wp) + (be Wp + bp))
    fold_w = p["enc_w"] @ p["pre_w"]                                  # [dim_in, D]
    fold_b = p["enc_b"] @ p["pre_w"] + p["pre_b"]                     # [1, D]

    cls_w_p = _pad_to(p["cls_w"], (P_K, P_D, P_O))                    # [K, D, O]
    # branch-concatenated classifier weight: wcat[d, k*P_O + o] = cls_w[k, d, o]
    cls_wcat = jnp.transpose(cls_w_p, (1, 0, 2)).reshape(P_D, P_K * P_O)
    return {
        "pre_w": _pad_to(fold_w, (P_IN, P_D)),
        "pre_b": _pad_to(fold_b, (1, P_D)),
        "mp_w": jnp.stack([_pad_to(w, (P_D, P_D)) for w in p["mp_w"]]),
        "mp_b": jnp.stack([_pad_to(b, (1, P_D)) for b in p["mp_b"]]),
        "attn_v": _pad_to(p["attn_v"], (P_D, P_HA)),
        "attn_u": _pad_to(p["attn_u"], (P_HA, P_K)),
        "cls_wcat": cls_wcat,
        "cls_b": _pad_to(p["cls_b"], (1, P_O)),
    }


def make_normalized_adjacency(key, n):
    # random symmetric binary adjacency with self loops, D^{-1/2} A D^{-1/2}
    raw = jax.random.bernoulli(key, p=0.3, shape=(n, n)).astype(jnp.float32)
    a = jnp.maximum(raw, raw.T)
    a = jnp.maximum(a, jnp.eye(n, dtype=jnp.float32))
    deg = jnp.sum(a, axis=1)
    d_inv_sqrt = 1.0 / jnp.sqrt(deg)
    return a * d_inv_sqrt[:, None] * d_inv_sqrt[None, :]


# ---------------------------- pure-JAX reference ---------------------------- #

def reference_forward(x, a_hat, p):
    h = x @ p["enc_w"] + p["enc_b"]
    h = jnp.maximum(h @ p["pre_w"] + p["pre_b"], 0.0)
    for w, b in zip(p["mp_w"], p["mp_b"]):
        h = jnp.maximum((a_hat @ h) @ w + b, 0.0)
    att = jnp.tanh(h @ p["attn_v"])
    alpha = jax.nn.softmax(att @ p["attn_u"], axis=0)          # [N, K]
    pooled = alpha.T @ h                                       # [K, D]
    k, d, o = p["cls_w"].shape
    return pooled.reshape(1, k * d) @ p["cls_w"].reshape(k * d, o) + p["cls_b"]


if __name__ == "__main__":
    # small shapes consistent with the module's forward
    N = 16            # nodes in the graph
    DIM_IN = 8        # input node-feature dim
    DIM_INNER = 32    # cfg.gnn.dim_inner
    ATTN_HIDDEN = 16  # attention MLP hidden dim
    BRANCHES = 4      # cfg.attn.attention_branches
    DIM_OUT = 4       # classifier output dim
    LAYERS_MP = 2     # cfg.gnn.layers_mp

    root = jax.random.PRNGKey(0)
    k_x, k_a, k_p = jax.random.split(root, 3)

    x = jax.random.normal(k_x, (N, DIM_IN), jnp.float32)
    a_hat = make_normalized_adjacency(k_a, N)
    params = make_params(k_p, DIM_IN, DIM_INNER, ATTN_HIDDEN, BRANCHES,
                         DIM_OUT, LAYERS_MP)

    x_p = _pad_to(x, (N, LANE))
    a_hat_bf16 = a_hat.astype(jnp.bfloat16)     # half the A_hat DMA
    pp = pad_params(params)

    logits_padded = multi_head_attn_gnn_forward(
        x_p, a_hat_bf16, pp, layers_mp=LAYERS_MP, num_branches=BRANCHES)
    logits_padded = jax.block_until_ready(logits_padded)
    logits = logits_padded[0:1, :DIM_OUT]
    assert logits.shape == (1, DIM_OUT)

    # correctness vs. pure-f32 reference (bf16 adjacency/aggregation + approx
    # reciprocal introduce only tiny deviations)
    ref = reference_forward(x, a_hat, params)
    np.testing.assert_allclose(np.asarray(logits), np.asarray(ref),
                               rtol=5e-2, atol=1e-2)
    print("KERNEL_OK")
</pallas_src>

<mosaic_0001>
module attributes {stable_mosaic.version = 11 : i64} {
  func.func @_fused_gnn_kernel(%arg0: memref<16x128xf32, #tpu.memory_space<vmem>>, %arg1: memref<16x16xbf16, #tpu.memory_space<vmem>>, %arg2: memref<128x128xf32, #tpu.memory_space<vmem>>, %arg3: memref<1x128xf32, #tpu.memory_space<vmem>>, %arg4: memref<2x128x128xf32, #tpu.memory_space<vmem>>, %arg5: memref<2x1x128xf32, #tpu.memory_space<vmem>>, %arg6: memref<128x128xf32, #tpu.memory_space<vmem>>, %arg7: memref<128x8xf32, #tpu.memory_space<vmem>>, %arg8: memref<128x1024xf32, #tpu.memory_space<vmem>>, %arg9: memref<1x128xf32, #tpu.memory_space<vmem>>, %arg10: memref<8x128xf32, #tpu.memory_space<vmem>>) attributes {dimension_semantics = [], scalar_prefetch = 0 : i64, scratch_operands = 0 : i64, tpu.core_type = #tpu.core_type<tc>} {
    %c0 = arith.constant 0 : index
    %c0_0 = arith.constant 0 : index
    %0 = vector.load %arg0[%c0, %c0_0] : memref<16x128xf32, #tpu.memory_space<vmem>>, vector<16x128xf32>
    %c0_1 = arith.constant 0 : index
    %c0_2 = arith.constant 0 : index
    %1 = vector.load %arg2[%c0_1, %c0_2] : memref<128x128xf32, #tpu.memory_space<vmem>>, vector<128x128xf32>
    %cst = arith.constant dense<0.000000e+00> : vector<16x128xf32>
    %2 = tpu.matmul %0, %1, %cst {dimension_numbers = #tpu.dot_dimension_numbers<[1], [0], [0], [1], [0, 0, 1, 1], [], []>} : vector<16x128xf32>, vector<128x128xf32>, vector<16x128xf32> -> vector<16x128xf32>
    %c0_3 = arith.constant 0 : index
    %c0_4 = arith.constant 0 : index
    %3 = vector.load %arg3[%c0_3, %c0_4] : memref<1x128xf32, #tpu.memory_space<vmem>>, vector<1x128xf32>
    %4 = vector.broadcast %3 : vector<1x128xf32> to vector<16x128xf32>
    %5 = arith.addf %2, %4 : vector<16x128xf32>
    %cst_5 = arith.constant 0.000000e+00 : f32
    %6 = vector.broadcast %cst_5 : f32 to vector<16x128xf32>
    %7 = arith.maximumf %5, %6 : vector<16x128xf32>
    %c0_6 = arith.constant 0 : index
    %c0_7 = arith.constant 0 : index
    %8 = vector.load %arg1[%c0_6, %c0_7] : memref<16x16xbf16, #tpu.memory_space<vmem>>, vector<16x16xbf16>
    %9 = arith.truncf %7 : vector<16x128xf32> to vector<16x128xbf16>
    %cst_8 = arith.constant dense<0.000000e+00> : vector<16x128xf32>
    %10 = tpu.matmul %8, %9, %cst_8 {dimension_numbers = #tpu.dot_dimension_numbers<[1], [0], [0], [1], [0, 0, 1, 1], [], []>} : vector<16x16xbf16>, vector<16x128xbf16>, vector<16x128xf32> -> vector<16x128xf32>
    %c0_9 = arith.constant 0 : index
    %c0_10 = arith.constant 0 : index
    %c0_11 = arith.constant 0 : index
    %11 = vector.load %arg4[%c0_9, %c0_10, %c0_11] : memref<2x128x128xf32, #tpu.memory_space<vmem>>, vector<1x128x128xf32>
    %12 = vector.shape_cast %11 : vector<1x128x128xf32> to vector<128x128xf32>
    %cst_12 = arith.constant dense<0.000000e+00> : vector<16x128xf32>
    %13 = tpu.matmul %10, %12, %cst_12 {dimension_numbers = #tpu.dot_dimension_numbers<[1], [0], [0], [1], [0, 0, 1, 1], [], []>} : vector<16x128xf32>, vector<128x128xf32>, vector<16x128xf32> -> vector<16x128xf32>
    %c0_13 = arith.constant 0 : index
    %c0_14 = arith.constant 0 : index
    %c0_15 = arith.constant 0 : index
    %14 = vector.load %arg5[%c0_13, %c0_14, %c0_15] : memref<2x1x128xf32, #tpu.memory_space<vmem>>, vector<1x1x128xf32>
    %15 = vector.shape_cast %14 : vector<1x1x128xf32> to vector<1x128xf32>
    %16 = vector.broadcast %15 : vector<1x128xf32> to vector<16x128xf32>
    %17 = arith.addf %13, %16 : vector<16x128xf32>
    %cst_16 = arith.constant 0.000000e+00 : f32
    %18 = vector.broadcast %cst_16 : f32 to vector<16x128xf32>
    %19 = arith.maximumf %17, %18 : vector<16x128xf32>
    %20 = arith.truncf %19 : vector<16x128xf32> to vector<16x128xbf16>
    %cst_17 = arith.constant dense<0.000000e+00> : vector<16x128xf32>
    %21 = tpu.matmul %8, %20, %cst_17 {dimension_numbers = #tpu.dot_dimension_numbers<[1], [0], [0], [1], [0, 0, 1, 1], [], []>} : vector<16x16xbf16>, vector<16x128xbf16>, vector<16x128xf32> -> vector<16x128xf32>
    %c1 = arith.constant 1 : index
    %c0_18 = arith.constant 0 : index
    %c0_19 = arith.constant 0 : index
    %22 = vector.load %arg4[%c1, %c0_18, %c0_19] : memref<2x128x128xf32, #tpu.memory_space<vmem>>, vector<1x128x128xf32>
    %23 = vector.shape_cast %22 : vector<1x128x128xf32> to vector<128x128xf32>
    %cst_20 = arith.constant dense<0.000000e+00> : vector<16x128xf32>
    %24 = tpu.matmul %21, %23, %cst_20 {dimension_numbers = #tpu.dot_dimension_numbers<[1], [0], [0], [1], [0, 0, 1, 1], [], []>} : vector<16x128xf32>, vector<128x128xf32>, vector<16x128xf32> -> vector<16x128xf32>
    %c1_21 = arith.constant 1 : index
    %c0_22 = arith.constant 0 : index
    %c0_23 = arith.constant 0 : index
    %25 = vector.load %arg5[%c1_21, %c0_22, %c0_23] : memref<2x1x128xf32, #tpu.memory_space<vmem>>, vector<1x1x128xf32>
    %26 = vector.shape_cast %25 : vector<1x1x128xf32> to vector<1x128xf32>
    %27 = vector.broadcast %26 : vector<1x128xf32> to vector<16x128xf32>
    %28 = arith.addf %24, %27 : vector<16x128xf32>
    %cst_24 = arith.constant 0.000000e+00 : f32
    %29 = vector.broadcast %cst_24 : f32 to vector<16x128xf32>
    %30 = arith.maximumf %28, %29 : vector<16x128xf32>
    %c0_25 = arith.constant 0 : index
    %c0_26 = arith.constant 0 : index
    %31 = vector.load %arg6[%c0_25, %c0_26] : memref<128x128xf32, #tpu.memory_space<vmem>>, vector<128x128xf32>
    %cst_27 = arith.constant dense<0.000000e+00> : vector<16x128xf32>
    %32 = tpu.matmul %30, %31, %cst_27 {dimension_numbers = #tpu.dot_dimension_numbers<[1], [0], [0], [1], [0, 0, 1, 1], [], []>} : vector<16x128xf32>, vector<128x128xf32>, vector<16x128xf32> -> vector<16x128xf32>
    %33 = math.tanh %32 : vector<16x128xf32>
    %c0_28 = arith.constant 0 : index
    %c0_29 = arith.constant 0 : index
    %34 = vector.load %arg7[%c0_28, %c0_29] : memref<128x8xf32, #tpu.memory_space<vmem>>, vector<128x8xf32>
    %cst_30 = arith.constant dense<0.000000e+00> : vector<16x8xf32>
    %35 = tpu.matmul %33, %34, %cst_30 {dimension_numbers = #tpu.dot_dimension_numbers<[1], [0], [0], [1], [0, 0, 1, 1], [], []>} : vector<16x128xf32>, vector<128x8xf32>, vector<16x8xf32> -> vector<16x8xf32>
    %cst_31 = arith.constant dense<0xFF800000> : vector<8xf32>
    %36 = vector.multi_reduction <maximumf>, %35, %cst_31 [0] : vector<16x8xf32> to vector<8xf32>
    %37 = vector.shape_cast %36 : vector<8xf32> to vector<1x8xf32>
    %38 = vector.broadcast %37 : vector<1x8xf32> to vector<16x8xf32>
    %39 = arith.subf %35, %38 : vector<16x8xf32>
    %40 = math.exp %39 : vector<16x8xf32>
    %cst_32 = arith.constant dense<0.000000e+00> : vector<8xf32>
    %41 = vector.multi_reduction <add>, %40, %cst_32 [0] : vector<16x8xf32> to vector<8xf32>
    %42 = vector.shape_cast %41 : vector<8xf32> to vector<1x8xf32>
    %43 = tpu.reciprocal %42 {approx = true} : vector<1x8xf32> -> vector<1x8xf32>
    %44 = vector.broadcast %43 : vector<1x8xf32> to vector<16x8xf32>
    %45 = arith.mulf %40, %44 : vector<16x8xf32>
    "tpu.trace_start"() <{level = 10 : i32, message = "nk,nd->kd"}> : () -> ()
    %cst_33 = arith.constant dense<0.000000e+00> : vector<8x128xf32>
    %46 = tpu.matmul %45, %30, %cst_33 {dimension_numbers = #tpu.dot_dimension_numbers<[0], [0], [1], [1], [0, 1, 1, 1], [], []>} : vector<16x8xf32>, vector<16x128xf32>, vector<8x128xf32> -> vector<8x128xf32>
    "tpu.trace_stop"() : () -> ()
    %c0_34 = arith.constant 0 : index
    %c0_35 = arith.constant 0 : index
    %47 = vector.load %arg8[%c0_34, %c0_35] : memref<128x1024xf32, #tpu.memory_space<vmem>>, vector<128x1024xf32>
    %cst_36 = arith.constant dense<0.000000e+00> : vector<8x1024xf32>
    %48 = tpu.matmul %46, %47, %cst_36 {dimension_numbers = #tpu.dot_dimension_numbers<[1], [0], [0], [1], [0, 0, 1, 1], [], []>} : vector<8x128xf32>, vector<128x1024xf32>, vector<8x1024xf32> -> vector<8x1024xf32>
    %c0_37 = arith.constant 0 : index
    %c0_38 = arith.constant 0 : index
    %49 = vector.load %arg9[%c0_37, %c0_38] : memref<1x128xf32, #tpu.memory_space<vmem>>, vector<1x128xf32>
    %50 = vector.extract_strided_slice %48 {offsets = [0, 0], sizes = [1, 128], strides = [1, 1]} : vector<8x1024xf32> to vector<1x128xf32>
    %51 = arith.addf %49, %50 : vector<1x128xf32>
    %52 = vector.extract_strided_slice %48 {offsets = [1, 128], sizes = [1, 128], strides = [1, 1]} : vector<8x1024xf32> to vector<1x128xf32>
    %53 = arith.addf %51, %52 : vector<1x128xf32>
    %54 = vector.extract_strided_slice %48 {offsets = [2, 256], sizes = [1, 128], strides = [1, 1]} : vector<8x1024xf32> to vector<1x128xf32>
    %55 = arith.addf %53, %54 : vector<1x128xf32>
    %56 = vector.extract_strided_slice %48 {offsets = [3, 384], sizes = [1, 128], strides = [1, 1]} : vector<8x1024xf32> to vector<1x128xf32>
    %57 = arith.addf %55, %56 : vector<1x128xf32>
    %58 = vector.shape_cast %57 : vector<1x128xf32> to vector<1x128xf32>
    %59 = vector.broadcast %58 : vector<1x128xf32> to vector<8x128xf32>
    %c0_39 = arith.constant 0 : index
    %c0_40 = arith.constant 0 : index
    %60 = vector.load %arg10[%c0_39, %c0_40] : memref<8x128xf32, #tpu.memory_space<vmem>>, vector<8x128xf32>
    tpu.vector_store %arg10[%c0_39, %c0_40], %59 {strides = array<i32>} : memref<8x128xf32, #tpu.memory_space<vmem>>, vector<8x128xf32>,
    return
  }
}

</mosaic_0001>

<llo_original>
// kernel: tpu_custom_call.1
$region0: #{tpu_custom_call.1}
  #allocation0 [shape = 'u32[]', space=smem, size = 0x4, offset = 0x4, fixed_abs, tag = 'smem constant byte address 0x4 - core index']
  #allocation1 [shape = 'u32[72,128]{1,0:T(1,128)}', space=vmem, size = 0x9000, scoped, tag = 'internal scratch']
  %s0 = inlined_call_operand.hbm [shape: f32[16,128], index: 0, kind: input, shape index: {}]
  %s1 = inlined_call_operand.vmem [shape: bf16[16,16], index: 1, kind: input, shape index: {}]
  %s2 = inlined_call_operand.vmem [shape: f32[128,128], index: 2, kind: input, shape index: {}]
  %s3 = inlined_call_operand.vmem [shape: f32[1,128], index: 3, kind: input, shape index: {}]
  %s4 = inlined_call_operand.hbm [shape: f32[2,128,128], index: 4, kind: input, shape index: {}]
  %s5 = inlined_call_operand.vmem [shape: f32[2,1,128], index: 5, kind: input, shape index: {}]
  %s6 = inlined_call_operand.hbm [shape: f32[128,128], index: 6, kind: input, shape index: {}]
  %s7 = inlined_call_operand.vmem [shape: f32[128,8], index: 7, kind: input, shape index: {}]
  %s8 = inlined_call_operand.hbm [shape: f32[128,1024], index: 8, kind: input, shape index: {}]
  %s9 = inlined_call_operand.vmem [shape: f32[1,128], index: 9, kind: input, shape index: {}]
  %s10 = inlined_call_operand.hbm [shape: f32[8,128], index: 10, kind: output, shape index: {}]
  %s11 = sld [smem:[#allocation0]]
  $region66: #{tpu_custom_call.1} parent=0
    _
  %s13 = ssub.s32 1, %s11
  %s14 = scalar_select 0, %s13, %s11
  $region1: #{tpu_custom_call.1} parent=0
    #allocation2 [shape = 'u8[8192]{0}', space=vmem, size = 0x2000, scoped, tag = 'input window, operand 0, single buffered']
    #allocation3 [shape = 's32[1]{0}', space=sflag, size = 0x4, scoped, tag = 'scoped memory for tpu_custom_call.1']
    #allocation4 [shape = 's32[1]{0}', space=sflag, size = 0x4, scoped, tag = 'scoped memory for tpu_custom_call.1']
    #allocation5 [shape = 'u8[131072]{0}', space=vmem, size = 0x20000, scoped, tag = 'input window, operand 4, single buffered']
    #allocation6 [shape = 's32[1]{0}', space=sflag, size = 0x4, scoped, tag = 'scoped memory for tpu_custom_call.1']
    #allocation7 [shape = 'u8[65536]{0}', space=vmem, size = 0x10000, scoped, tag = 'input window, operand 6, single buffered']
    #allocation8 [shape = 'u8[524288]{0}', space=vmem, size = 0x80000, scoped, tag = 'input window, operand 8, single buffered']
    #allocation9 [shape = 's32[1]{0}', space=sflag, size = 0x4, scoped, tag = 'scoped memory for tpu_custom_call.1']
    #allocation10 [shape = 'u8[4096]{0}', space=vmem, size = 0x1000, scoped, tag = 'output window, operand 0, single buffered']
    %15 = vsyncpa [#allocation3], 0
    %16 = vsyncpa [#allocation6], 0
    %17 = vsyncpa [#allocation9], 0
    %18 = vsyncpa [#allocation4], 0
    // Predicated region
    $region2: #{tpu_custom_call.1} parent=1 // pred_check
      _
    $region3: #{tpu_custom_call.1} parent=1 // pred_check_branch
      %20 = sbr.rel (0) target = $region5
    $region4: #{tpu_custom_call.1} parent=1 // pred_region
      %22 = vsyncadd [#allocation3], 0
      %s23 = sshll.u32 %s0, 4
      %s24 = int_to_ptr.hbm [resolvable:$true] %s23
      %s25 = sshll.u32 [#allocation2], 4
      %s26 = int_to_ptr.vmem [resolvable:$true] %s25
      %31 = dma.hbm_to_vmem [thread:$0]  %s24, 256, %s26, [#allocation3], 128, 128, 8
    $region5: #{tpu_custom_call.1} parent=1 // pred_fallthru
      _
    // Predicated region
    $region6: #{tpu_custom_call.1} parent=1 // pred_check
      _
    $region7: #{tpu_custom_call.1} parent=1 // pred_check_branch
      %33 = sbr.rel (0) target = $region9
    $region8: #{tpu_custom_call.1} parent=1 // pred_region
      _
    $region9: #{tpu_custom_call.1} parent=1 // pred_fallthru
      _
    // Predicated region
    $region10: #{tpu_custom_call.1} parent=1 // pred_check
      _
    $region11: #{tpu_custom_call.1} parent=1 // pred_check_branch
      %35 = sbr.rel (0) target = $region13
    $region12: #{tpu_custom_call.1} parent=1 // pred_region
      _
    $region13: #{tpu_custom_call.1} parent=1 // pred_fallthru
      _
    // Predicated region
    $region14: #{tpu_custom_call.1} parent=1 // pred_check
      _
    $region15: #{tpu_custom_call.1} parent=1 // pred_check_branch
      %37 = sbr.rel (0) target = $region17
    $region16: #{tpu_custom_call.1} parent=1 // pred_region
      _
    $region17: #{tpu_custom_call.1} parent=1 // pred_fallthru
      _
    // Predicated region
    $region18: #{tpu_custom_call.1} parent=1 // pred_check
      _
    $region19: #{tpu_custom_call.1} parent=1 // pred_check_branch
      %39 = sbr.rel (0) target = $region21
    $region20: #{tpu_custom_call.1} parent=1 // pred_region
      %41 = vsyncadd [#allocation6], 0
      %s42 = sshll.u32 %s4, 4
      %s43 = int_to_ptr.hbm [resolvable:$true] %s42
      %s44 = sshll.u32 [#allocation5], 4
      %s45 = int_to_ptr.vmem [resolvable:$true] %s44
      %50 = dma.hbm_to_vmem [thread:$0]  %s43, 4096, %s45, [#allocation6], 128, 128, 8
    $region21: #{tpu_custom_call.1} parent=1 // pred_fallthru
      _
    // Predicated region
    $region22: #{tpu_custom_call.1} parent=1 // pred_check
      _
    $region23: #{tpu_custom_call.1} parent=1 // pred_check_branch
      %52 = sbr.rel (0) target = $region25
    $region24: #{tpu_custom_call.1} parent=1 // pred_region
      _
    $region25: #{tpu_custom_call.1} parent=1 // pred_fallthru
      _
    // Predicated region
    $region26: #{tpu_custom_call.1} parent=1 // pred_check
      _
    $region27: #{tpu_custom_call.1} parent=1 // pred_check_branch
      %54 = sbr.rel (0) target = $region29
    $region28: #{tpu_custom_call.1} parent=1 // pred_region
      %56 = vsyncadd [#allocation6], 0
      %s57 = sshll.u32 %s6, 4
      %s58 = int_to_ptr.hbm [resolvable:$true] %s57
      %s59 = sshll.u32 [#allocation7], 4
      %s60 = int_to_ptr.vmem [resolvable:$true] %s59
      %65 = dma.hbm_to_vmem [thread:$0]  %s58, 2048, %s60, [#allocation6], 128, 128, 8
    $region29: #{tpu_custom_call.1} parent=1 // pred_fallthru
      _
    // Predicated region
    $region30: #{tpu_custom_call.1} parent=1 // pred_check
      _
    $region31: #{tpu_custom_call.1} parent=1 // pred_check_branch
      %67 = sbr.rel (0) target = $region33
    $region32: #{tpu_custom_call.1} parent=1 // pred_region
      _
    $region33: #{tpu_custom_call.1} parent=1 // pred_fallthru
      _
    // Predicated region
    $region34: #{tpu_custom_call.1} parent=1 // pred_check
      _
    $region35: #{tpu_custom_call.1} parent=1 // pred_check_branch
      %69 = sbr.rel (0) target = $region37
    $region36: #{tpu_custom_call.1} parent=1 // pred_region
      %71 = vsyncadd [#allocation9], 0
      %s72 = sshll.u32 %s8, 4
      %s73 = int_to_ptr.hbm [resolvable:$true] %s72
      %s74 = sshll.u32 [#allocation8], 4
      %s75 = int_to_ptr.vmem [resolvable:$true] %s74
      %80 = dma.hbm_to_vmem [thread:$0]  %s73, 16384, %s75, [#allocation9], 1024, 1024, 64
    $region37: #{tpu_custom_call.1} parent=1 // pred_fallthru
      _
    // Predicated region
    $region38: #{tpu_custom_call.1} parent=1 // pred_check
      _
    $region39: #{tpu_custom_call.1} parent=1 // pred_check_branch
      %82 = sbr.rel (0) target = $region41
    $region40: #{tpu_custom_call.1} parent=1 // pred_region
      _
    $region41: #{tpu_custom_call.1} parent=1 // pred_fallthru
      _
    // Predicated region
    $region42: #{tpu_custom_call.1} parent=1 // pred_check
      _
    $region43: #{tpu_custom_call.1} parent=1 // pred_check_branch
      %84 = sbr.rel (0) target = $region45
    $region44: #{tpu_custom_call.1} parent=1 // pred_region
      %86 = dma.done [#allocation3], 256
    $region45: #{tpu_custom_call.1} parent=1 // pred_fallthru
      _
    // Predicated region
    $region46: #{tpu_custom_call.1} parent=1 // pred_check
      _
    $region47: #{tpu_custom_call.1} parent=1 // pred_check_branch
      %88 = sbr.rel (0) target = $region49
    $region48: #{tpu_custom_call.1} parent=1 // pred_region
      %90 = dma.done [#allocation6], 4096
    $region49: #{tpu_custom_call.1} parent=1 // pred_fallthru
      _
    // Predicated region
    $region50: #{tpu_custom_call.1} parent=1 // pred_check
      _
    $region51: #{tpu_custom_call.1} parent=1 // pred_check_branch
      %92 = sbr.rel (0) target = $region53
    $region52: #{tpu_custom_call.1} parent=1 // pred_region
      %94 = dma.done [#allocation6], 2048
    $region53: #{tpu_custom_call.1} parent=1 // pred_fallthru
      _
    // Predicated region
    $region54: #{tpu_custom_call.1} parent=1 // pred_check
      _
    $region55: #{tpu_custom_call.1} parent=1 // pred_check_branch
      %96 = sbr.rel (0) target = $region57
    $region56: #{tpu_custom_call.1} parent=1 // pred_region
      %98 = dma.done [#allocation9], 16384
    $region57: #{tpu_custom_call.1} parent=1 // pred_fallthru
      _
    %v100 = vld [vmem:[#allocation2] sm:$0xff]
    %v101 = vld [vmem:[#allocation2 + $0x8] sm:$0xff]
    %v102 = vld [vmem:[%s2] sm:$0xff]
    %v103 = vld [vmem:[%s2 + $0x8] sm:$0xff]
    %v104 = vld [vmem:[%s2 + $0x10] sm:$0xff]
    %v105 = vld [vmem:[%s2 + $0x18] sm:$0xff]
    %v106 = vld [vmem:[%s2 + $0x20] sm:$0xff]
    %v107 = vld [vmem:[%s2 + $0x28] sm:$0xff]
    %v108 = vld [vmem:[%s2 + $0x30] sm:$0xff]
    %v109 = vld [vmem:[%s2 + $0x38] sm:$0xff]
    %v110 = vld [vmem:[%s2 + $0x40] sm:$0xff]
    %v111 = vld [vmem:[%s2 + $0x48] sm:$0xff]
    %v112 = vld [vmem:[%s2 + $0x50] sm:$0xff]
    %v113 = vld [vmem:[%s2 + $0x58] sm:$0xff]
    %v114 = vld [vmem:[%s2 + $0x60] sm:$0xff]
    %v115 = vld [vmem:[%s2 + $0x68] sm:$0xff]
    %v116 = vld [vmem:[%s2 + $0x70] sm:$0xff]
    %v117 = vld [vmem:[%s2 + $0x78] sm:$0xff]
    %v118 = vld [vmem:[%s3] sm:$0x1]
    %v120 = vperm.slane %v118, 0
    %122 = vmatpush.msra.mxu0 %v117
    %123 = vmatpush.msra.mxu0 %v116
    %124 = vmatpush.msra.mxu0 %v115
    %125 = vmatpush.msra.mxu0 %v114
    %126 = vmatpush.msra.mxu0 %v113
    %127 = vmatpush.msra.mxu0 %v112
    %128 = vmatpush.msra.mxu0 %v111
    %129 = vmatpush.msra.mxu0 %v110
    %130 = vmatpush.msra.mxu0 %v109
    %131 = vmatpush.msra.mxu0 %v108
    %132 = vmatpush.msra.mxu0 %v107
    %133 = vmatpush.msra.mxu0 %v106
    %134 = vmatpush.msra.mxu0 %v105
    %135 = vmatpush.msra.mxu0 %v104
    %136 = vmatpush.msra.mxu0 %v103
    %137 = vmatpush.msra.mxu0 %v102
    %138 = vmatmul.f32.gmra.mxu0 %v100
    %v139 = vpop.f32.mrf.mxu0
    %v140 = vadd.f32 %v120, %v139
    %141 = vmatmul.f32.gmra.mxu0 %v101
    %v142 = vpop.f32.mrf.mxu0
    %v143 = vadd.f32 %v120, %v142
    %144 = vdwg.mxu0
    %v145 = vmax.f32 %v140, 0.0
    %v146 = vmax.f32 %v143, 0.0
    %v147 = vld [vmem:[%s1] sm:$0xf]
    %v148 = vld [vmem:[%s1 + $0x4] sm:$0xf]
    %v149 = vpack.c.bf16 %v146, %v145
    %v152 = vunpack.c.l.b16 %v147
    %v153 = vunpack.c.l.b16 %v148
    %v154 = vpack.c.b16 %v153, %v152
    %vm155 = vcmask 130048
    %v157 = vsel %vm155, %v154, 0
    %159 = vmatpush.bf16.msra.mxu0 0
    %160 = vmatpush.bf16.msra.mxu0 0
    %161 = vmatpush.bf16.msra.mxu0 0
    %162 = vmatpush.bf16.msra.mxu0 0
    %163 = vmatpush.bf16.msra.mxu0 0
    %164 = vmatpush.bf16.msra.mxu0 0
    %165 = vmatpush.bf16.msra.mxu0 0
    %166 = vmatpush.bf16.msra.mxu0 %v149
    %167 = vmatmul.bf16.gmra.mxu0 %v157
    %v168 = vpop.f32.mrf.mxu0
    %v169 = vadd.f32 0.0, %v168
    %v170 = vpop.f32.mrf.mxu0
    %v171 = vadd.f32 0.0, %v170
    %172 = vdwg.mxu0
    %v173 = vld [vmem:[#allocation5] sm:$0xff]
    %v174 = vld [vmem:[#allocation5 + $0x8] sm:$0xff]
    %v175 = vld [vmem:[#allocation5 + $0x10] sm:$0xff]
    %v176 = vld [vmem:[#allocation5 + $0x18] sm:$0xff]
    %v177 = vld [vmem:[#allocation5 + $0x20] sm:$0xff]
    %v178 = vld [vmem:[#allocation5 + $0x28] sm:$0xff]
    %v179 = vld [vmem:[#allocation5 + $0x30] sm:$0xff]
    %v180 = vld [vmem:[#allocation5 + $0x38] sm:$0xff]
    %v181 = vld [vmem:[#allocation5 + $0x40] sm:$0xff]
    %v182 = vld [vmem:[#allocation5 + $0x48] sm:$0xff]
    %v183 = vld [vmem:[#allocation5 + $0x50] sm:$0xff]
    %v184 = vld [vmem:[#allocation5 + $0x58] sm:$0xff]
    %v185 = vld [vmem:[#allocation5 + $0x60] sm:$0xff]
    %v186 = vld [vmem:[#allocation5 + $0x68] sm:$0xff]
    %v187 = vld [vmem:[#allocation5 + $0x70] sm:$0xff]
    %v188 = vld [vmem:[#allocation5 + $0x78] sm:$0xff]
    %v189 = vld [vmem:[%s5] sm:$0x1]
    %v191 = vperm.slane %v189, 0
    %193 = vmatpush.msra.mxu0 %v188
    %194 = vmatpush.msra.mxu0 %v187
    %195 = vmatpush.msra.mxu0 %v186
    %196 = vmatpush.msra.mxu0 %v185
    %197 = vmatpush.msra.mxu0 %v184
    %198 = vmatpush.msra.mxu0 %v183
    %199 = vmatpush.msra.mxu0 %v182
    %200 = vmatpush.msra.mxu0 %v181
    %201 = vmatpush.msra.mxu0 %v180
    %202 = vmatpush.msra.mxu0 %v179
    %203 = vmatpush.msra.mxu0 %v178
    %204 = vmatpush.msra.mxu0 %v177
    %205 = vmatpush.msra.mxu0 %v176
    %206 = vmatpush.msra.mxu0 %v175
    %207 = vmatpush.msra.mxu0 %v174
    %208 = vmatpush.msra.mxu0 %v173
    %209 = vmatmul.f32.gmra.mxu0 %v169
    %v210 = vpop.f32.mrf.mxu0
    %v211 = vadd.f32 %v191, %v210
    %212 = vmatmul.f32.gmra.mxu0 %v171
    %v213 = vpop.f32.mrf.mxu0
    %v214 = vadd.f32 %v191, %v213
    %215 = vdwg.mxu0
    %v216 = vmax.f32 %v211, 0.0
    %v217 = vmax.f32 %v214, 0.0
    %v218 = vpack.c.bf16 %v217, %v216
    %219 = vmatpush.bf16.msra.mxu0 0
    %220 = vmatpush.bf16.msra.mxu0 0
    %221 = vmatpush.bf16.msra.mxu0 0
    %222 = vmatpush.bf16.msra.mxu0 0
    %223 = vmatpush.bf16.msra.mxu0 0
    %224 = vmatpush.bf16.msra.mxu0 0
    %225 = vmatpush.bf16.msra.mxu0 0
    %226 = vmatpush.bf16.msra.mxu0 %v218
    %227 = vmatmul.bf16.gmra.mxu0 %v157
    %v228 = vpop.f32.mrf.mxu0
    %v229 = vadd.f32 0.0, %v228
    %v230 = vpop.f32.mrf.mxu0
    %v231 = vadd.f32 0.0, %v230
    %232 = vdwg.mxu0
    %s233 = scalar_lea.vmem [#allocation5], 128
    %v234 = vld [vmem:[%s233] sm:$0xff]
    %v235 = vld [vmem:[%s233 + $0x8] sm:$0xff]
    %v236 = vld [vmem:[%s233 + $0x10] sm:$0xff]
    %v237 = vld [vmem:[%s233 + $0x18] sm:$0xff]
    %v238 = vld [vmem:[%s233 + $0x20] sm:$0xff]
    %v239 = vld [vmem:[%s233 + $0x28] sm:$0xff]
    %v240 = vld [vmem:[%s233 + $0x30] sm:$0xff]
    %v241 = vld [vmem:[%s233 + $0x38] sm:$0xff]
    %v242 = vld [vmem:[%s233 + $0x40] sm:$0xff]
    %v243 = vld [vmem:[%s233 + $0x48] sm:$0xff]
    %v244 = vld [vmem:[%s233 + $0x50] sm:$0xff]
    %v245 = vld [vmem:[%s233 + $0x58] sm:$0xff]
    %v246 = vld [vmem:[%s233 + $0x60] sm:$0xff]
    %v247 = vld [vmem:[%s233 + $0x68] sm:$0xff]
    %v248 = vld [vmem:[%s233 + $0x70] sm:$0xff]
    %v249 = vld [vmem:[%s233 + $0x78] sm:$0xff]
    %s250 = scalar_lea.vmem %s5, 1
    %v251 = vld [vmem:[%s250] sm:$0x1]
    %v253 = vperm.slane %v251, 0
    %255 = vmatpush.msra.mxu0 %v249
    %256 = vmatpush.msra.mxu0 %v248
    %257 = vmatpush.msra.mxu0 %v247
    %258 = vmatpush.msra.mxu0 %v246
    %259 = vmatpush.msra.mxu0 %v245
    %260 = vmatpush.msra.mxu0 %v244
    %261 = vmatpush.msra.mxu0 %v243
    %262 = vmatpush.msra.mxu0 %v242
    %263 = vmatpush.msra.mxu0 %v241
    %264 = vmatpush.msra.mxu0 %v240
    %265 = vmatpush.msra.mxu0 %v239
    %266 = vmatpush.msra.mxu0 %v238
    %267 = vmatpush.msra.mxu0 %v237
    %268 = vmatpush.msra.mxu0 %v236
    %269 = vmatpush.msra.mxu0 %v235
    %270 = vmatpush.msra.mxu0 %v234
    %271 = vmatmul.f32.gmra.mxu0 %v229
    %v272 = vpop.f32.mrf.mxu0
    %v273 = vadd.f32 %v253, %v272
    %274 = vmatmul.f32.gmra.mxu0 %v231
    %v275 = vpop.f32.mrf.mxu0
    %v276 = vadd.f32 %v253, %v275
    %277 = vdwg.mxu0
    %v278 = vmax.f32 %v273, 0.0
    %v279 = vmax.f32 %v276, 0.0
    %v280 = vld [vmem:[#allocation7] sm:$0xff]
    %v281 = vld [vmem:[#allocation7 + $0x8] sm:$0xff]
    %v282 = vld [vmem:[#allocation7 + $0x10] sm:$0xff]
    %v283 = vld [vmem:[#allocation7 + $0x18] sm:$0xff]
    %v284 = vld [vmem:[#allocation7 + $0x20] sm:$0xff]
    %v285 = vld [vmem:[#allocation7 + $0x28] sm:$0xff]
    %v286 = vld [vmem:[#allocation7 + $0x30] sm:$0xff]
    %v287 = vld [vmem:[#allocation7 + $0x38] sm:$0xff]
    %v288 = vld [vmem:[#allocation7 + $0x40] sm:$0xff]
    %v289 = vld [vmem:[#allocation7 + $0x48] sm:$0xff]
    %v290 = vld [vmem:[#allocation7 + $0x50] sm:$0xff]
    %v291 = vld [vmem:[#allocation7 + $0x58] sm:$0xff]
    %v292 = vld [vmem:[#allocation7 + $0x60] sm:$0xff]
    %v293 = vld [vmem:[#allocation7 + $0x68] sm:$0xff]
    %v294 = vld [vmem:[#allocation7 + $0x70] sm:$0xff]
    %v295 = vld [vmem:[#allocation7 + $0x78] sm:$0xff]
    %296 = vmatpush.msra.mxu0 %v295
    %297 = vmatpush.msra.mxu0 %v294
    %298 = vmatpush.msra.mxu0 %v293
    %299 = vmatpush.msra.mxu0 %v292
    %300 = vmatpush.msra.mxu0 %v291
    %301 = vmatpush.msra.mxu0 %v290
    %302 = vmatpush.msra.mxu0 %v289
    %303 = vmatpush.msra.mxu0 %v288
    %304 = vmatpush.msra.mxu0 %v287
    %305 = vmatpush.msra.mxu0 %v286
    %306 = vmatpush.msra.mxu0 %v285
    %307 = vmatpush.msra.mxu0 %v284
    %308 = vmatpush.msra.mxu0 %v283
    %309 = vmatpush.msra.mxu0 %v282
    %310 = vmatpush.msra.mxu0 %v281
    %311 = vmatpush.msra.mxu0 %v280
    %312 = vmatmul.f32.gmra.mxu0 %v278
    %v313 = vpop.f32.mrf.mxu0
    %v314 = vadd.f32 0.0, %v313
    %315 = vmatmul.f32.gmra.mxu0 %v279
    %v316 = vpop.f32.mrf.mxu0
    %v317 = vadd.f32 0.0, %v316
    %318 = vdwg.mxu0
    %v319 = vtanh.pop %v314
    %v320 = vtanh.pop %v317
    %v321 = vld [vmem:[%s7] sm:$0xff]
    %v322 = vld [vmem:[%s7 + $0x8] sm:$0xff]
    %v323 = vld [vmem:[%s7 + $0x10] sm:$0xff]
    %v324 = vld [vmem:[%s7 + $0x18] sm:$0xff]
    %v325 = vld [vmem:[%s7 + $0x20] sm:$0xff]
    %v326 = vld [vmem:[%s7 + $0x28] sm:$0xff]
    %v327 = vld [vmem:[%s7 + $0x30] sm:$0xff]
    %v328 = vld [vmem:[%s7 + $0x38] sm:$0xff]
    %v329 = vld [vmem:[%s7 + $0x40] sm:$0xff]
    %v330 = vld [vmem:[%s7 + $0x48] sm:$0xff]
    %v331 = vld [vmem:[%s7 + $0x50] sm:$0xff]
    %v332 = vld [vmem:[%s7 + $0x58] sm:$0xff]
    %v333 = vld [vmem:[%s7 + $0x60] sm:$0xff]
    %v334 = vld [vmem:[%s7 + $0x68] sm:$0xff]
    %v335 = vld [vmem:[%s7 + $0x70] sm:$0xff]
    %v336 = vld [vmem:[%s7 + $0x78] sm:$0xff]
    %337 = vmatpush.msra.mxu0 %v336
    %338 = vmatpush.msra.mxu0 %v335
    %339 = vmatpush.msra.mxu0 %v334
    %340 = vmatpush.msra.mxu0 %v333
    %341 = vmatpush.msra.mxu0 %v332
    %342 = vmatpush.msra.mxu0 %v331
    %343 = vmatpush.msra.mxu0 %v330
    %344 = vmatpush.msra.mxu0 %v329
    %345 = vmatpush.msra.mxu0 %v328
    %346 = vmatpush.msra.mxu0 %v327
    %347 = vmatpush.msra.mxu0 %v326
    %348 = vmatpush.msra.mxu0 %v325
    %349 = vmatpush.msra.mxu0 %v324
    %350 = vmatpush.msra.mxu0 %v323
    %351 = vmatpush.msra.mxu0 %v322
    %352 = vmatpush.msra.mxu0 %v321
    %353 = vmatmul.f32.gmra.mxu0 %v319
    %v354 = vpop.f32.mrf.mxu0
    %v355 = vadd.f32 0.0, %v354
    %356 = vmatmul.f32.gmra.mxu0 %v320
    %v357 = vpop.f32.mrf.mxu0
    %v358 = vadd.f32 0.0, %v357
    %359 = vdwg.mxu0
    %vm360 = vcmask 64512
    %v361 = vsel %vm360, %v355, -inf
    %v362 = vsel %vm360, %v358, -inf
    %v363 = vmax.f32 %v361, %v362
    %v364 = vrot.slane %v363, 4
    %v365 = vmax.f32 %v363, %v364
    %v366 = vrot.slane %v365, 2
    %v367 = vmax.f32 %v365, %v366
    %v368 = vrot.slane %v367, 1
    %v369 = vmax.f32 %v367, %v368
    %v370 = vsub.f32 %v355, %v369
    %v371 = vsub.f32 %v358, %v369
    %v372 = vmul.f32 %v370, 1.442695
    %v373 = vpow.pop %v372
    %v374 = vmul.f32 %v371, 1.442695
    %v375 = vpow.pop %v374
    %v376 = vsel %vm360, %v373, 0.0
    %v377 = vsel %vm360, %v375, 0.0
    %v378 = vadd.f32 %v376, %v377
    %v379 = vrot.slane %v378, 4
    %v380 = vadd.f32 %v378, %v379
    %v381 = vrot.slane %v380, 2
    %v382 = vadd.f32 %v380, %v381
    %v383 = vrot.slane %v382, 1
    %v384 = vadd.f32 %v382, %v383
    %v385 = vrcp.pop %v384
    %v386 = vmul.f32 %v373, %v385
    %v387 = vmul.f32 %v375, %v385
    %388 = vxpose.xlu0.b32.start [1/16] %v386, 128
    %389 = vxpose.xlu0.b32.cont [2/16] %v387, 128
    %390 = vxpose.xlu0.b32.cont [3/16] 0.0, 128
    %391 = vxpose.xlu0.b32.cont [4/16] 0.0, 128
    %392 = vxpose.xlu0.b32.cont [5/16] 0.0, 128
    %393 = vxpose.xlu0.b32.cont [6/16] 0.0, 128
    %394 = vxpose.xlu0.b32.cont [7/16] 0.0, 128
    %395 = vxpose.xlu0.b32.cont [8/16] 0.0, 128
    %396 = vxpose.xlu0.b32.cont [9/16] 0.0, 128
    %397 = vxpose.xlu0.b32.cont [10/16] 0.0, 128
    %398 = vxpose.xlu0.b32.cont [11/16] 0.0, 128
    %399 = vxpose.xlu0.b32.cont [12/16] 0.0, 128
    %400 = vxpose.xlu0.b32.cont [13/16] 0.0, 128
    %401 = vxpose.xlu0.b32.cont [14/16] 0.0, 128
    %402 = vxpose.xlu0.b32.cont [15/16] 0.0, 128
    %403 = vxpose.xlu0.b32.end [16/16] 0.0, 128
    %v404 = vpop.trf.xlu0
    %v405 = vpop.trf.xlu0
    %v406 = vpop.trf.xlu0
    %v407 = vpop.trf.xlu0
    %v408 = vpop.trf.xlu0
    %v409 = vpop.trf.xlu0
    %v410 = vpop.trf.xlu0
    %v411 = vpop.trf.xlu0
    %v412 = vpop.trf.xlu0
    %v413 = vpop.trf.xlu0
    %v414 = vpop.trf.xlu0
    %v415 = vpop.trf.xlu0
    %v416 = vpop.trf.xlu0
    %v417 = vpop.trf.xlu0
    %v418 = vpop.trf.xlu0
    %v419 = vpop.trf.xlu0
    %v421 = vsel %vm155, %v404, 0
    %423 = vmatpush.msra.mxu0 0.0
    %424 = vmatpush.msra.mxu0 0.0
    %425 = vmatpush.msra.mxu0 0.0
    %426 = vmatpush.msra.mxu0 0.0
    %427 = vmatpush.msra.mxu0 0.0
    %428 = vmatpush.msra.mxu0 0.0
    %429 = vmatpush.msra.mxu0 0.0
    %430 = vmatpush.msra.mxu0 0.0
    %431 = vmatpush.msra.mxu0 0.0
    %432 = vmatpush.msra.mxu0 0.0
    %433 = vmatpush.msra.mxu0 0.0
    %434 = vmatpush.msra.mxu0 0.0
    %435 = vmatpush.msra.mxu0 0.0
    %436 = vmatpush.msra.mxu0 0.0
    %437 = vmatpush.msra.mxu0 %v279
    %438 = vmatpush.msra.mxu0 %v278
    %439 = vmatmul.f32.gmra.mxu0 %v421
    %v440 = vpop.f32.mrf.mxu0
    %v441 = vadd.f32 0.0, %v440
    %442 = vdwg.mxu0
    %v443 = vld [vmem:[#allocation8] sm:$0xff]
    %v444 = vld [vmem:[#allocation8 + $0x8] sm:$0xff]
    %v445 = vld [vmem:[#allocation8 + $0x10] sm:$0xff]
    %v446 = vld [vmem:[#allocation8 + $0x18] sm:$0xff]
    %v447 = vld [vmem:[#allocation8 + $0x40] sm:$0xff]
    %v448 = vld [vmem:[#allocation8 + $0x48] sm:$0xff]
    %v449 = vld [vmem:[#allocation8 + $0x50] sm:$0xff]
    %v450 = vld [vmem:[#allocation8 + $0x58] sm:$0xff]
    %v451 = vld [vmem:[#allocation8 + $0x80] sm:$0xff]
    %v452 = vld [vmem:[#allocation8 + $0x88] sm:$0xff]
    %v453 = vld [vmem:[#allocation8 + $0x90] sm:$0xff]
    %v454 = vld [vmem:[#allocation8 + $0x98] sm:$0xff]
    %v455 = vld [vmem:[#allocation8 + $0xc0] sm:$0xff]
    %v456 = vld [vmem:[#allocation8 + $0xc8] sm:$0xff]
    %v457 = vld [vmem:[#allocation8 + $0xd0] sm:$0xff]
    %v458 = vld [vmem:[#allocation8 + $0xd8] sm:$0xff]
    %v459 = vld [vmem:[#allocation8 + $0x100] sm:$0xff]
    %v460 = vld [vmem:[#allocation8 + $0x108] sm:$0xff]
    %v461 = vld [vmem:[#allocation8 + $0x110] sm:$0xff]
    %v462 = vld [vmem:[#allocation8 + $0x118] sm:$0xff]
    %v463 = vld [vmem:[#allocation8 + $0x140] sm:$0xff]
    %v464 = vld [vmem:[#allocation8 + $0x148] sm:$0xff]
    %v465 = vld [vmem:[#allocation8 + $0x150] sm:$0xff]
    %v466 = vld [vmem:[#allocation8 + $0x158] sm:$0xff]
    %v467 = vld [vmem:[#allocation8 + $0x180] sm:$0xff]
    %v468 = vld [vmem:[#allocation8 + $0x188] sm:$0xff]
    %v469 = vld [vmem:[#allocation8 + $0x190] sm:$0xff]
    %v470 = vld [vmem:[#allocation8 + $0x198] sm:$0xff]
    %v471 = vld [vmem:[#allocation8 + $0x1c0] sm:$0xff]
    %v472 = vld [vmem:[#allocation8 + $0x1c8] sm:$0xff]
    %v473 = vld [vmem:[#allocation8 + $0x1d0] sm:$0xff]
    %v474 = vld [vmem:[#allocation8 + $0x1d8] sm:$0xff]
    %v475 = vld [vmem:[#allocation8 + $0x200] sm:$0xff]
    %v476 = vld [vmem:[#allocation8 + $0x208] sm:$0xff]
    %v477 = vld [vmem:[#allocation8 + $0x210] sm:$0xff]
    %v478 = vld [vmem:[#allocation8 + $0x218] sm:$0xff]
    %v479 = vld [vmem:[#allocation8 + $0x240] sm:$0xff]
    %v480 = vld [vmem:[#allocation8 + $0x248] sm:$0xff]
    %v481 = vld [vmem:[#allocation8 + $0x250] sm:$0xff]
    %v482 = vld [vmem:[#allocation8 + $0x258] sm:$0xff]
    %v483 = vld [vmem:[#allocation8 + $0x280] sm:$0xff]
    %v484 = vld [vmem:[#allocation8 + $0x288] sm:$0xff]
    %v485 = vld [vmem:[#allocation8 + $0x290] sm:$0xff]
    %v486 = vld [vmem:[#allocation8 + $0x298] sm:$0xff]
    %v487 = vld [vmem:[#allocation8 + $0x2c0] sm:$0xff]
    %v488 = vld [vmem:[#allocation8 + $0x2c8] sm:$0xff]
    %v489 = vld [vmem:[#allocation8 + $0x2d0] sm:$0xff]
    %v490 = vld [vmem:[#allocation8 + $0x2d8] sm:$0xff]
    %v491 = vld [vmem:[#allocation8 + $0x300] sm:$0xff]
    %v492 = vld [vmem:[#allocation8 + $0x308] sm:$0xff]
    %v493 = vld [vmem:[#allocation8 + $0x310] sm:$0xff]
    %v494 = vld [vmem:[#allocation8 + $0x318] sm:$0xff]
    %v495 = vld [vmem:[#allocation8 + $0x340] sm:$0xff]
    %v496 = vld [vmem:[#allocation8 + $0x348] sm:$0xff]
    %v497 = vld [vmem:[#allocation8 + $0x350] sm:$0xff]
    %v498 = vld [vmem:[#allocation8 + $0x358] sm:$0xff]
    %v499 = vld [vmem:[#allocation8 + $0x380] sm:$0xff]
    %v500 = vld [vmem:[#allocation8 + $0x388] sm:$0xff]
    %v501 = vld [vmem:[#allocation8 + $0x390] sm:$0xff]
    %v502 = vld [vmem:[#allocation8 + $0x398] sm:$0xff]
    %v503 = vld [vmem:[#allocation8 + $0x3c0] sm:$0xff]
    %v504 = vld [vmem:[#allocation8 + $0x3c8] sm:$0xff]
    %v505 = vld [vmem:[#allocation8 + $0x3d0] sm:$0xff]
    %v506 = vld [vmem:[#allocation8 + $0x3d8] sm:$0xff]
    %507 = vmatpush.msra.mxu0 %v503
    %508 = vmatpush.msra.mxu0 %v499
    %509 = vmatpush.msra.mxu0 %v495
    %510 = vmatpush.msra.mxu0 %v491
    %511 = vmatpush.msra.mxu0 %v487
    %512 = vmatpush.msra.mxu0 %v483
    %513 = vmatpush.msra.mxu0 %v479
    %514 = vmatpush.msra.mxu0 %v475
    %515 = vmatpush.msra.mxu0 %v471
    %516 = vmatpush.msra.mxu0 %v467
    %517 = vmatpush.msra.mxu0 %v463
    %518 = vmatpush.msra.mxu0 %v459
    %519 = vmatpush.msra.mxu0 %v455
    %520 = vmatpush.msra.mxu0 %v451
    %521 = vmatpush.msra.mxu0 %v447
    %522 = vmatpush.msra.mxu0 %v443
    %523 = vmatmul.f32.gmra.mxu0 %v441
    %v524 = vpop.f32.mrf.mxu0
    %v525 = vadd.f32 0.0, %v524
    %526 = vdwg.mxu0
    %527 = vmatpush.msra.mxu0 %v504
    %528 = vmatpush.msra.mxu0 %v500
    %529 = vmatpush.msra.mxu0 %v496
    %530 = vmatpush.msra.mxu0 %v492
    %531 = vmatpush.msra.mxu0 %v488
    %532 = vmatpush.msra.mxu0 %v484
    %533 = vmatpush.msra.mxu0 %v480
    %534 = vmatpush.msra.mxu0 %v476
    %535 = vmatpush.msra.mxu0 %v472
    %536 = vmatpush.msra.mxu0 %v468
    %537 = vmatpush.msra.mxu0 %v464
    %538 = vmatpush.msra.mxu0 %v460
    %539 = vmatpush.msra.mxu0 %v456
    %540 = vmatpush.msra.mxu0 %v452
    %541 = vmatpush.msra.mxu0 %v448
    %542 = vmatpush.msra.mxu0 %v444
    %543 = vmatmul.f32.gmra.mxu0 %v441
    %v544 = vpop.f32.mrf.mxu0
    %v545 = vadd.f32 0.0, %v544
    %546 = vdwg.mxu0
    %547 = vmatpush.msra.mxu0 %v505
    %548 = vmatpush.msra.mxu0 %v501
    %549 = vmatpush.msra.mxu0 %v497
    %550 = vmatpush.msra.mxu0 %v493
    %551 = vmatpush.msra.mxu0 %v489
    %552 = vmatpush.msra.mxu0 %v485
    %553 = vmatpush.msra.mxu0 %v481
    %554 = vmatpush.msra.mxu0 %v477
    %555 = vmatpush.msra.mxu0 %v473
    %556 = vmatpush.msra.mxu0 %v469
    %557 = vmatpush.msra.mxu0 %v465
    %558 = vmatpush.msra.mxu0 %v461
    %559 = vmatpush.msra.mxu0 %v457
    %560 = vmatpush.msra.mxu0 %v453
    %561 = vmatpush.msra.mxu0 %v449
    %562 = vmatpush.msra.mxu0 %v445
    %563 = vmatmul.f32.gmra.mxu0 %v441
    %v564 = vpop.f32.mrf.mxu0
    %v565 = vadd.f32 0.0, %v564
    %566 = vdwg.mxu0
    %567 = vmatpush.msra.mxu0 %v506
    %568 = vmatpush.msra.mxu0 %v502
    %569 = vmatpush.msra.mxu0 %v498
    %570 = vmatpush.msra.mxu0 %v494
    %571 = vmatpush.msra.mxu0 %v490
    %572 = vmatpush.msra.mxu0 %v486
    %573 = vmatpush.msra.mxu0 %v482
    %574 = vmatpush.msra.mxu0 %v478
    %575 = vmatpush.msra.mxu0 %v474
    %576 = vmatpush.msra.mxu0 %v470
    %577 = vmatpush.msra.mxu0 %v466
    %578 = vmatpush.msra.mxu0 %v462
    %579 = vmatpush.msra.mxu0 %v458
    %580 = vmatpush.msra.mxu0 %v454
    %581 = vmatpush.msra.mxu0 %v450
    %582 = vmatpush.msra.mxu0 %v446
    %583 = vmatmul.f32.gmra.mxu0 %v441
    %v584 = vpop.f32.mrf.mxu0
    %v585 = vadd.f32 0.0, %v584
    %586 = vdwg.mxu0
    %v587 = vld [vmem:[%s9] sm:$0x1]
    %v588 = vadd.f32 %v587, %v525
    %590 = vst [vmem:[#allocation1] sm:$0xff] %v545
    %s591 = scalar_lea.vmem [#allocation1], 1
    %v592 = vld [vmem:[%s591] ss:$9 sm:$0xff]
    %v594 = vadd.f32 %v588, %v592
    %596 = vst [vmem:[#allocation1] sm:$0xff] %v565
    %s597 = scalar_lea.vmem [#allocation1], 2
    %v598 = vld [vmem:[%s597] ss:$9 sm:$0xff]
    %v600 = vadd.f32 %v594, %v598
    %602 = vst [vmem:[#allocation1] sm:$0xff] %v585
    %s603 = scalar_lea.vmem [#allocation1], 3
    %v604 = vld [vmem:[%s603] ss:$9 sm:$0xff]
    %v606 = vadd.f32 %v600, %v604
    %v608 = vperm.slane %v606, 0
    %610 = vst [vmem:[#allocation10] sm:$0xff] %v608
    // Predicated region
    $region58: #{tpu_custom_call.1} parent=1 // pred_check
      _
    $region59: #{tpu_custom_call.1} parent=1 // pred_check_branch
      %612 = sbr.rel (0) target = $region61
    $region60: #{tpu_custom_call.1} parent=1 // pred_region
      %614 = vsyncadd [#allocation4], 0
      %s616 = sshll.u32 [#allocation10], 4
      %s617 = int_to_ptr.vmem [resolvable:$true] %s616
      %s618 = sshll.u32 %s10, 4
      %s619 = int_to_ptr.hbm [resolvable:$true] %s618
      %621 = dma.vmem_to_hbm [thread:$0]  %s617, 128, %s619, [#allocation4]
    $region61: #{tpu_custom_call.1} parent=1 // pred_fallthru
      _
    // Predicated region
    $region62: #{tpu_custom_call.1} parent=1 // pred_check
      _
    $region63: #{tpu_custom_call.1} parent=1 // pred_check_branch
      %623 = sbr.rel (0) target = $region65
    $region64: #{tpu_custom_call.1} parent=1 // pred_region
      %625 = dma.done [#allocation4], 128
    $region65: #{tpu_custom_call.1} parent=1 // pred_fallthru
      _
    %626 = vsyncpa [#allocation3], 1
    %627 = vsyncpa [#allocation6], 1
    %628 = vsyncpa [#allocation9], 1
    %629 = vsyncpa [#allocation4], 1

</llo_original>
